<compile_context>
chip_gen: v5e
topology: v5e:2x2
jax: 0.10.0
libtpu: 0.0.40
codegen_flags: <defaults>
</compile_context>

<pallas_src>
import functools

import numpy as np
import jax
import jax.numpy as jnp
from jax.experimental import pallas as pl
from jax.experimental.pallas import tpu as pltpu


def _round_up(x, m):
    return ((x + m - 1) // m) * m


# ----------------------------- fused Pallas kernel -----------------------------

def _fused_encoder_kernel(x_ref, keep_ref, w1_ref, b1_ref, w2_ref, b2_ref,
                          g_ref, beta_ref, o_ref, *, n_layers, d_model):
    # x_ref    : (tile, D)   f32  embedded + positional activation rows
    # keep_ref : (tile, 1)   f32  1.0 for real tokens, 0.0 for pad tokens
    # w1_ref   : (L, D, I)   bf16 stacked layer weights (resident in VMEM)
    # b1_ref   : (L, 1, I)   f32
    # w2_ref   : (L, I, D)   bf16
    # b2_ref, g_ref, beta_ref : (L, 1, D) f32
    x = x_ref[...]
    keep = keep_ref[...]                      # (tile, 1), broadcasts over lanes
    inv_d = jnp.float32(1.0 / d_model)

    # n_layers is small and static -> unrolled; weights stay resident in VMEM.
    # TODO(synk): switch to lax.fori_loop with dynamic w1_ref[l] indexing if
    # n_layers grows beyond ~8 (code-size / vreg-pressure bound, no extra HBM cost).
    for l in range(n_layers):
        # MXU in bf16 operands, f32 accumulation.
        h = jnp.dot(x.astype(jnp.bfloat16), w1_ref[l],
                    preferred_element_type=jnp.float32) + b1_ref[l]
        h = jnp.maximum(h, 0.0)                                       # ReLU
        y = jnp.dot(h.astype(jnp.bfloat16), w2_ref[l],
                    preferred_element_type=jnp.float32) + b2_ref[l] + x
        # LayerNorm (exact two-pass over the true d_model width), eps = 1e-5.
        mu = jnp.sum(y, axis=-1, keepdims=True) * inv_d
        diff = y - mu
        var = jnp.sum(diff * diff, axis=-1, keepdims=True) * inv_d
        y = diff * jax.lax.rsqrt(var + 1e-5) * g_ref[l] + beta_ref[l]
        x = y * keep                                                  # masked_fill(pad, 0)

    o_ref[...] = x


# ----------------------------- wrapper -----------------------------

def positionwise_encoder_pallas(src_seq, src_pos, params, *, tile=512):
    """src_seq: (B, S, d_src) float32, src_pos: (B, S) int32 (pad = -1)."""
    B, S, d_src = src_seq.shape
    d_model = params["w_emb"].shape[1]
    d_inner = params["layers"][0]["w1"].shape[1]
    n_layers = len(params["layers"])
    L = n_layers
    N = B * S

    # --- glue (fused by XLA): tiny embedding matmul (K=d_src) + sinusoid gather ---
    x = src_seq.reshape(N, d_src)
    pos_emb = jnp.take(params["pos_table"], src_pos.reshape(N) + 1, axis=0)
    enc0 = (x @ params["w_emb"] + pos_emb).astype(jnp.float32)        # (N, d_model)
    keep = (src_pos.reshape(N, 1) != -1).astype(jnp.float32)          # (N, 1)

    # Row tile: multiple of 8, capped so the grid has >= 2 steps (v7x megacore),
    # and at most the requested tile (multiple of 256 for large N -> full MXU passes).
    tile = max(8, min(tile, _round_up(pl.cdiv(N, 2), 8)))
    grid = (pl.cdiv(N, tile),)

    # Stacked per-layer parameters; matmul weights in bf16 (MXU operands), the rest f32.
    w1 = jnp.stack([lp["w1"] for lp in params["layers"]]).astype(jnp.bfloat16)
    w2 = jnp.stack([lp["w2"] for lp in params["layers"]]).astype(jnp.bfloat16)
    b1 = jnp.stack([lp["b1"] for lp in params["layers"]]).astype(jnp.float32)
    b2 = jnp.stack([lp["b2"] for lp in params["layers"]]).astype(jnp.float32)
    g = jnp.stack([lp["gamma"] for lp in params["layers"]]).astype(jnp.float32)
    bt = jnp.stack([lp["beta"] for lp in params["layers"]]).astype(jnp.float32)

    def resident(shape):
        # Grid-invariant block: constant index_map, single buffer (no double-buffering).
        return pl.BlockSpec(shape, lambda i: (0,) * len(shape),
                            pipeline_mode=pl.Buffered(1))

    kernel = functools.partial(_fused_encoder_kernel,
                               n_layers=n_layers, d_model=d_model)

    # VMEM budget: single-buffered resident weights + double-buffered activation
    # in/out tiles + keep column + headroom for the (tile, d_inner) intermediate.
    w_bytes = (w1.size + w2.size) * 2 + (b1.size + b2.size + g.size + bt.size) * 4
    act_bytes = tile * d_model * 4
    h_bytes = tile * d_inner * 4
    budget = w_bytes + 4 * act_bytes + 2 * h_bytes + 4 * tile * 4 + (8 << 20)
    vmem_limit = int(min(max(budget, 32 << 20), 96 << 20))
    # TODO(synk): if L*2*D*I bf16 weights exceed ~48 MiB (v7x has 64 MiB VMEM/TC),
    # restructure to a 2-D grid (rows "parallel", layer "arbitrary") streaming one
    # layer's weights per step with the activation tile resident in VMEM scratch.

    flops = 4 * L * N * d_model * d_inner                 # two matmuls per layer
    bytes_accessed = 2 * N * d_model * 4 + N * 4 + int(w_bytes)

    out = pl.pallas_call(
        kernel,
        grid_spec=pltpu.PrefetchScalarGridSpec(
            num_scalar_prefetch=0,
            grid=grid,
            in_specs=[
                pl.BlockSpec((tile, d_model), lambda i: (i, 0)),   # activation rows
                pl.BlockSpec((tile, 1), lambda i: (i, 0)),         # keep column
                resident((L, d_model, d_inner)),                   # w1 (bf16)
                resident((L, 1, d_inner)),                         # b1
                resident((L, d_inner, d_model)),                   # w2 (bf16)
                resident((L, 1, d_model)),                         # b2
                resident((L, 1, d_model)),                         # gamma
                resident((L, 1, d_model)),                         # beta
            ],
            out_specs=pl.BlockSpec((tile, d_model), lambda i: (i, 0)),
        ),
        out_shape=jax.ShapeDtypeStruct((N, d_model), jnp.float32),
        compiler_params=pltpu.CompilerParams(
            dimension_semantics=("parallel",),
            vmem_limit_bytes=vmem_limit),
        cost_estimate=pl.CostEstimate(flops=flops,
                                      transcendentals=L * N,
                                      bytes_accessed=bytes_accessed),
    )(enc0, keep, w1, b1, w2, b2, g, bt)

    return out.reshape(B, S, d_model)


# ----------------------------- parameter setup -----------------------------

def get_sinusoid_encoding_table(n_position, d_hid, padding_idx=None):
    pos = np.arange(n_position)[:, None].astype(np.float64)
    hid = np.arange(d_hid)[None, :]
    table = pos / np.power(10000.0, 2.0 * (hid // 2) / d_hid)
    table[:, 0::2] = np.sin(table[:, 0::2])
    table[:, 1::2] = np.cos(table[:, 1::2])
    if padding_idx is not None:
        table[padding_idx] = 0.0
    return jnp.asarray(table, dtype=jnp.float32)


def init_params(key, d_src, d_model, d_inner, len_max, n_layers):
    k_emb, *lkeys = jax.random.split(key, 1 + n_layers)
    params = {
        "w_emb": (jax.random.normal(k_emb, (d_src, d_model), jnp.float32)
                  * np.sqrt(2.0 / (d_src + d_model))),
        "pos_table": get_sinusoid_encoding_table(len_max + 1, d_model, padding_idx=0),
        "layers": [],
    }
    for i in range(n_layers):
        k1, k2, k3, k4 = jax.random.split(lkeys[i], 4)
        params["layers"].append({
            "w1": jax.random.normal(k1, (d_model, d_inner), jnp.float32) * 0.1,
            "b1": jax.random.normal(k2, (1, d_inner), jnp.float32) * 0.05,
            "w2": jax.random.normal(k3, (d_inner, d_model), jnp.float32) * 0.1,
            "b2": jax.random.normal(k4, (1, d_model), jnp.float32) * 0.05,
            "gamma": jnp.ones((1, d_model), jnp.float32),
            "beta": jnp.zeros((1, d_model), jnp.float32),
        })
    return params


# pure-JAX f32 reference for correctness checking
def positionwise_encoder_ref(src_seq, src_pos, params):
    keep = (src_pos != -1).astype(jnp.float32)[:, :, None]
    enc = src_seq @ params["w_emb"] + jnp.take(params["pos_table"], src_pos + 1, axis=0)
    for lp in params["layers"]:
        h = jnp.maximum(enc @ lp["w1"] + lp["b1"], 0.0)
        y = h @ lp["w2"] + lp["b2"] + enc
        mu = jnp.mean(y, axis=-1, keepdims=True)
        var = jnp.mean((y - mu) ** 2, axis=-1, keepdims=True)
        y = (y - mu) / jnp.sqrt(var + 1e-5) * lp["gamma"] + lp["beta"]
        enc = y * keep
    return enc


# ----------------------------- main -----------------------------

if __name__ == "__main__":
    B, S = 2, 8
    d_src, d_model, d_inner = 6, 32, 64
    len_max, n_layers = 16, 2

    key = jax.random.PRNGKey(0)
    k_seq, k_par = jax.random.split(key)

    src_seq = jax.random.normal(k_seq, (B, S, d_src), jnp.float32)
    # positions 0..L-1, padded with -1 (module's pad value)
    src_pos_np = np.full((B, S), -1, dtype=np.int32)
    for b, Lb in enumerate([S, 5]):
        src_pos_np[b, :Lb] = np.arange(Lb)
    src_pos = jnp.asarray(src_pos_np)

    params = init_params(k_par, d_src, d_model, d_inner, len_max, n_layers)

    out = positionwise_encoder_pallas(src_seq, src_pos, params)
    out = jax.block_until_ready(out)

    ref = positionwise_encoder_ref(src_seq, src_pos, params)
    # Tolerance accounts for bf16 MXU operands in the kernel (per perf review);
    # the reference matmuls run in f32.
    np.testing.assert_allclose(np.asarray(out), np.asarray(ref), rtol=2e-2, atol=2e-2)

    print("KERNEL_OK")
</pallas_src>

<mosaic_0001>
module attributes {stable_mosaic.version = 11 : i64} {
  func.func @_fused_encoder_kernel(%arg0: i32, %arg1: memref<8x32xf32, #tpu.memory_space<vmem>>, %arg2: memref<8x1xf32, #tpu.memory_space<vmem>>, %arg3: memref<2x32x64xbf16, #tpu.memory_space<vmem>>, %arg4: memref<2x1x64xf32, #tpu.memory_space<vmem>>, %arg5: memref<2x64x32xbf16, #tpu.memory_space<vmem>>, %arg6: memref<2x1x32xf32, #tpu.memory_space<vmem>>, %arg7: memref<2x1x32xf32, #tpu.memory_space<vmem>>, %arg8: memref<2x1x32xf32, #tpu.memory_space<vmem>>, %arg9: memref<8x32xf32, #tpu.memory_space<vmem>>) attributes {dimension_semantics = [#tpu.dimension_semantics<parallel>], iteration_bounds = array<i64: 2>, scalar_prefetch = 0 : i64, scratch_operands = 0 : i64, tpu.core_type = #tpu.core_type<tc>, window_params = [{transform_indices = @transform_0, window_bounds = array<i64: 8, 32>}, {transform_indices = @transform_1, window_bounds = array<i64: 8, 1>}, {pipeline_mode = #tpu.pipeline_mode<synchronous>, transform_indices = @transform_2, window_bounds = array<i64: 2, 32, 64>}, {pipeline_mode = #tpu.pipeline_mode<synchronous>, transform_indices = @transform_3, window_bounds = array<i64: 2, 1, 64>}, {pipeline_mode = #tpu.pipeline_mode<synchronous>, transform_indices = @transform_4, window_bounds = array<i64: 2, 64, 32>}, {pipeline_mode = #tpu.pipeline_mode<synchronous>, transform_indices = @transform_5, window_bounds = array<i64: 2, 1, 32>}, {pipeline_mode = #tpu.pipeline_mode<synchronous>, transform_indices = @transform_6, window_bounds = array<i64: 2, 1, 32>}, {pipeline_mode = #tpu.pipeline_mode<synchronous>, transform_indices = @transform_7, window_bounds = array<i64: 2, 1, 32>}, {transform_indices = @transform_8, window_bounds = array<i64: 8, 32>}]} {
    %c0 = arith.constant 0 : index
    %c0_0 = arith.constant 0 : index
    %0 = vector.load %arg1[%c0, %c0_0] : memref<8x32xf32, #tpu.memory_space<vmem>>, vector<8x32xf32>
    %c0_1 = arith.constant 0 : index
    %c0_2 = arith.constant 0 : index
    %1 = vector.load %arg2[%c0_1, %c0_2] : memref<8x1xf32, #tpu.memory_space<vmem>>, vector<8x1xf32>
    %2 = arith.truncf %0 : vector<8x32xf32> to vector<8x32xbf16>
    %c0_3 = arith.constant 0 : index
    %c0_4 = arith.constant 0 : index
    %c0_5 = arith.constant 0 : index
    %3 = vector.load %arg3[%c0_3, %c0_4, %c0_5] : memref<2x32x64xbf16, #tpu.memory_space<vmem>>, vector<1x32x64xbf16>
    %4 = vector.shape_cast %3 : vector<1x32x64xbf16> to vector<32x64xbf16>
    %cst = arith.constant dense<0.000000e+00> : vector<8x64xf32>
    %5 = tpu.matmul %2, %4, %cst {dimension_numbers = #tpu.dot_dimension_numbers<[1], [0], [0], [1], [0, 0, 1, 1], [], []>} : vector<8x32xbf16>, vector<32x64xbf16>, vector<8x64xf32> -> vector<8x64xf32>
    %c0_6 = arith.constant 0 : index
    %c0_7 = arith.constant 0 : index
    %c0_8 = arith.constant 0 : index
    %6 = vector.load %arg4[%c0_6, %c0_7, %c0_8] : memref<2x1x64xf32, #tpu.memory_space<vmem>>, vector<1x1x64xf32>
    %7 = vector.shape_cast %6 : vector<1x1x64xf32> to vector<1x64xf32>
    %8 = vector.broadcast %7 : vector<1x64xf32> to vector<8x64xf32>
    %9 = arith.addf %5, %8 : vector<8x64xf32>
    %cst_9 = arith.constant 0.000000e+00 : f32
    %10 = vector.broadcast %cst_9 : f32 to vector<8x64xf32>
    %11 = arith.maximumf %9, %10 : vector<8x64xf32>
    %12 = arith.truncf %11 : vector<8x64xf32> to vector<8x64xbf16>
    %c0_10 = arith.constant 0 : index
    %c0_11 = arith.constant 0 : index
    %c0_12 = arith.constant 0 : index
    %13 = vector.load %arg5[%c0_10, %c0_11, %c0_12] : memref<2x64x32xbf16, #tpu.memory_space<vmem>>, vector<1x64x32xbf16>
    %14 = vector.shape_cast %13 : vector<1x64x32xbf16> to vector<64x32xbf16>
    %cst_13 = arith.constant dense<0.000000e+00> : vector<8x32xf32>
    %15 = tpu.matmul %12, %14, %cst_13 {dimension_numbers = #tpu.dot_dimension_numbers<[1], [0], [0], [1], [0, 0, 1, 1], [], []>} : vector<8x64xbf16>, vector<64x32xbf16>, vector<8x32xf32> -> vector<8x32xf32>
    %c0_14 = arith.constant 0 : index
    %c0_15 = arith.constant 0 : index
    %c0_16 = arith.constant 0 : index
    %16 = vector.load %arg6[%c0_14, %c0_15, %c0_16] : memref<2x1x32xf32, #tpu.memory_space<vmem>>, vector<1x1x32xf32>
    %17 = vector.shape_cast %16 : vector<1x1x32xf32> to vector<1x32xf32>
    %18 = vector.broadcast %17 : vector<1x32xf32> to vector<8x32xf32>
    %19 = arith.addf %15, %18 : vector<8x32xf32>
    %20 = arith.addf %19, %0 : vector<8x32xf32>
    %cst_17 = arith.constant dense<0.000000e+00> : vector<8xf32>
    %21 = vector.multi_reduction <add>, %20, %cst_17 [1] : vector<8x32xf32> to vector<8xf32>
    %22 = vector.shape_cast %21 : vector<8xf32> to vector<8x1xf32>
    %cst_18 = arith.constant 3.125000e-02 : f32
    %23 = vector.broadcast %cst_18 : f32 to vector<8x1xf32>
    %24 = arith.mulf %22, %23 : vector<8x1xf32>
    %25 = vector.broadcast %24 : vector<8x1xf32> to vector<8x32xf32>
    %26 = arith.subf %20, %25 : vector<8x32xf32>
    %27 = arith.mulf %26, %26 : vector<8x32xf32>
    %cst_19 = arith.constant dense<0.000000e+00> : vector<8xf32>
    %28 = vector.multi_reduction <add>, %27, %cst_19 [1] : vector<8x32xf32> to vector<8xf32>
    %29 = vector.shape_cast %28 : vector<8xf32> to vector<8x1xf32>
    %cst_20 = arith.constant 3.125000e-02 : f32
    %30 = vector.broadcast %cst_20 : f32 to vector<8x1xf32>
    %31 = arith.mulf %29, %30 : vector<8x1xf32>
    %cst_21 = arith.constant 9.99999974E-6 : f32
    %32 = vector.broadcast %cst_21 : f32 to vector<8x1xf32>
    %33 = arith.addf %31, %32 : vector<8x1xf32>
    %34 = math.rsqrt %33 : vector<8x1xf32>
    %35 = vector.broadcast %34 : vector<8x1xf32> to vector<8x32xf32>
    %36 = arith.mulf %26, %35 : vector<8x32xf32>
    %c0_22 = arith.constant 0 : index
    %c0_23 = arith.constant 0 : index
    %c0_24 = arith.constant 0 : index
    %37 = vector.load %arg7[%c0_22, %c0_23, %c0_24] : memref<2x1x32xf32, #tpu.memory_space<vmem>>, vector<1x1x32xf32>
    %38 = vector.shape_cast %37 : vector<1x1x32xf32> to vector<1x32xf32>
    %39 = vector.broadcast %38 : vector<1x32xf32> to vector<8x32xf32>
    %40 = arith.mulf %36, %39 : vector<8x32xf32>
    %c0_25 = arith.constant 0 : index
    %c0_26 = arith.constant 0 : index
    %c0_27 = arith.constant 0 : index
    %41 = vector.load %arg8[%c0_25, %c0_26, %c0_27] : memref<2x1x32xf32, #tpu.memory_space<vmem>>, vector<1x1x32xf32>
    %42 = vector.shape_cast %41 : vector<1x1x32xf32> to vector<1x32xf32>
    %43 = vector.broadcast %42 : vector<1x32xf32> to vector<8x32xf32>
    %44 = arith.addf %40, %43 : vector<8x32xf32>
    %45 = vector.broadcast %1 : vector<8x1xf32> to vector<8x32xf32>
    %46 = arith.mulf %44, %45 : vector<8x32xf32>
    %47 = arith.truncf %46 : vector<8x32xf32> to vector<8x32xbf16>
    %c1 = arith.constant 1 : index
    %c0_28 = arith.constant 0 : index
    %c0_29 = arith.constant 0 : index
    %48 = vector.load %arg3[%c1, %c0_28, %c0_29] : memref<2x32x64xbf16, #tpu.memory_space<vmem>>, vector<1x32x64xbf16>
    %49 = vector.shape_cast %48 : vector<1x32x64xbf16> to vector<32x64xbf16>
    %cst_30 = arith.constant dense<0.000000e+00> : vector<8x64xf32>
    %50 = tpu.matmul %47, %49, %cst_30 {dimension_numbers = #tpu.dot_dimension_numbers<[1], [0], [0], [1], [0, 0, 1, 1], [], []>} : vector<8x32xbf16>, vector<32x64xbf16>, vector<8x64xf32> -> vector<8x64xf32>
    %c1_31 = arith.constant 1 : index
    %c0_32 = arith.constant 0 : index
    %c0_33 = arith.constant 0 : index
    %51 = vector.load %arg4[%c1_31, %c0_32, %c0_33] : memref<2x1x64xf32, #tpu.memory_space<vmem>>, vector<1x1x64xf32>
    %52 = vector.shape_cast %51 : vector<1x1x64xf32> to vector<1x64xf32>
    %53 = vector.broadcast %52 : vector<1x64xf32> to vector<8x64xf32>
    %54 = arith.addf %50, %53 : vector<8x64xf32>
    %cst_34 = arith.constant 0.000000e+00 : f32
    %55 = vector.broadcast %cst_34 : f32 to vector<8x64xf32>
    %56 = arith.maximumf %54, %55 : vector<8x64xf32>
    %57 = arith.truncf %56 : vector<8x64xf32> to vector<8x64xbf16>
    %c1_35 = arith.constant 1 : index
    %c0_36 = arith.constant 0 : index
    %c0_37 = arith.constant 0 : index
    %58 = vector.load %arg5[%c1_35, %c0_36, %c0_37] : memref<2x64x32xbf16, #tpu.memory_space<vmem>>, vector<1x64x32xbf16>
    %59 = vector.shape_cast %58 : vector<1x64x32xbf16> to vector<64x32xbf16>
    %cst_38 = arith.constant dense<0.000000e+00> : vector<8x32xf32>
    %60 = tpu.matmul %57, %59, %cst_38 {dimension_numbers = #tpu.dot_dimension_numbers<[1], [0], [0], [1], [0, 0, 1, 1], [], []>} : vector<8x64xbf16>, vector<64x32xbf16>, vector<8x32xf32> -> vector<8x32xf32>
    %c1_39 = arith.constant 1 : index
    %c0_40 = arith.constant 0 : index
    %c0_41 = arith.constant 0 : index
    %61 = vector.load %arg6[%c1_39, %c0_40, %c0_41] : memref<2x1x32xf32, #tpu.memory_space<vmem>>, vector<1x1x32xf32>
    %62 = vector.shape_cast %61 : vector<1x1x32xf32> to vector<1x32xf32>
    %63 = vector.broadcast %62 : vector<1x32xf32> to vector<8x32xf32>
    %64 = arith.addf %60, %63 : vector<8x32xf32>
    %65 = arith.addf %64, %46 : vector<8x32xf32>
    %cst_42 = arith.constant dense<0.000000e+00> : vector<8xf32>
    %66 = vector.multi_reduction <add>, %65, %cst_42 [1] : vector<8x32xf32> to vector<8xf32>
    %67 = vector.shape_cast %66 : vector<8xf32> to vector<8x1xf32>
    %cst_43 = arith.constant 3.125000e-02 : f32
    %68 = vector.broadcast %cst_43 : f32 to vector<8x1xf32>
    %69 = arith.mulf %67, %68 : vector<8x1xf32>
    %70 = vector.broadcast %69 : vector<8x1xf32> to vector<8x32xf32>
    %71 = arith.subf %65, %70 : vector<8x32xf32>
    %72 = arith.mulf %71, %71 : vector<8x32xf32>
    %cst_44 = arith.constant dense<0.000000e+00> : vector<8xf32>
    %73 = vector.multi_reduction <add>, %72, %cst_44 [1] : vector<8x32xf32> to vector<8xf32>
    %74 = vector.shape_cast %73 : vector<8xf32> to vector<8x1xf32>
    %cst_45 = arith.constant 3.125000e-02 : f32
    %75 = vector.broadcast %cst_45 : f32 to vector<8x1xf32>
    %76 = arith.mulf %74, %75 : vector<8x1xf32>
    %cst_46 = arith.constant 9.99999974E-6 : f32
    %77 = vector.broadcast %cst_46 : f32 to vector<8x1xf32>
    %78 = arith.addf %76, %77 : vector<8x1xf32>
    %79 = math.rsqrt %78 : vector<8x1xf32>
    %80 = vector.broadcast %79 : vector<8x1xf32> to vector<8x32xf32>
    %81 = arith.mulf %71, %80 : vector<8x32xf32>
    %c1_47 = arith.constant 1 : index
    %c0_48 = arith.constant 0 : index
    %c0_49 = arith.constant 0 : index
    %82 = vector.load %arg7[%c1_47, %c0_48, %c0_49] : memref<2x1x32xf32, #tpu.memory_space<vmem>>, vector<1x1x32xf32>
    %83 = vector.shape_cast %82 : vector<1x1x32xf32> to vector<1x32xf32>
    %84 = vector.broadcast %83 : vector<1x32xf32> to vector<8x32xf32>
    %85 = arith.mulf %81, %84 : vector<8x32xf32>
    %c1_50 = arith.constant 1 : index
    %c0_51 = arith.constant 0 : index
    %c0_52 = arith.constant 0 : index
    %86 = vector.load %arg8[%c1_50, %c0_51, %c0_52] : memref<2x1x32xf32, #tpu.memory_space<vmem>>, vector<1x1x32xf32>
    %87 = vector.shape_cast %86 : vector<1x1x32xf32> to vector<1x32xf32>
    %88 = vector.broadcast %87 : vector<1x32xf32> to vector<8x32xf32>
    %89 = arith.addf %85, %88 : vector<8x32xf32>
    %90 = vector.broadcast %1 : vector<8x1xf32> to vector<8x32xf32>
    %91 = arith.mulf %89, %90 : vector<8x32xf32>
    %c0_53 = arith.constant 0 : index
    %c0_54 = arith.constant 0 : index
    %92 = vector.load %arg9[%c0_53, %c0_54] : memref<8x32xf32, #tpu.memory_space<vmem>>, vector<8x32xf32>
    tpu.vector_store %arg9[%c0_53, %c0_54], %91 {strides = array<i32>} : memref<8x32xf32, #tpu.memory_space<vmem>>, vector<8x32xf32>,
    return
  }
  func.func @transform_0(%arg0: i32) -> (i32, i32) {
    %c0_i32 = arith.constant 0 : i32
    %c0_i32_0 = arith.constant 0 : i32
    return %arg0, %c0_i32 : i32, i32
  }
  func.func @transform_1(%arg0: i32) -> (i32, i32) {
    %c0_i32 = arith.constant 0 : i32
    %c0_i32_0 = arith.constant 0 : i32
    return %arg0, %c0_i32 : i32, i32
  }
  func.func @transform_2(%arg0: i32) -> (i32, i32, i32) {
    %c0_i32 = arith.constant 0 : i32
    %c0_i32_0 = arith.constant 0 : i32
    %c0_i32_1 = arith.constant 0 : i32
    %c0_i32_2 = arith.constant 0 : i32
    return %c0_i32, %c0_i32_0, %c0_i32_1 : i32, i32, i32
  }
  func.func @transform_3(%arg0: i32) -> (i32, i32, i32) {
    %c0_i32 = arith.constant 0 : i32
    %c0_i32_0 = arith.constant 0 : i32
    %c0_i32_1 = arith.constant 0 : i32
    %c0_i32_2 = arith.constant 0 : i32
    return %c0_i32, %c0_i32_0, %c0_i32_1 : i32, i32, i32
  }
  func.func @transform_4(%arg0: i32) -> (i32, i32, i32) {
    %c0_i32 = arith.constant 0 : i32
    %c0_i32_0 = arith.constant 0 : i32
    %c0_i32_1 = arith.constant 0 : i32
    %c0_i32_2 = arith.constant 0 : i32
    return %c0_i32, %c0_i32_0, %c0_i32_1 : i32, i32, i32
  }
  func.func @transform_5(%arg0: i32) -> (i32, i32, i32) {
    %c0_i32 = arith.constant 0 : i32
    %c0_i32_0 = arith.constant 0 : i32
    %c0_i32_1 = arith.constant 0 : i32
    %c0_i32_2 = arith.constant 0 : i32
    return %c0_i32, %c0_i32_0, %c0_i32_1 : i32, i32, i32
  }
  func.func @transform_6(%arg0: i32) -> (i32, i32, i32) {
    %c0_i32 = arith.constant 0 : i32
    %c0_i32_0 = arith.constant 0 : i32
    %c0_i32_1 = arith.constant 0 : i32
    %c0_i32_2 = arith.constant 0 : i32
    return %c0_i32, %c0_i32_0, %c0_i32_1 : i32, i32, i32
  }
  func.func @transform_7(%arg0: i32) -> (i32, i32, i32) {
    %c0_i32 = arith.constant 0 : i32
    %c0_i32_0 = arith.constant 0 : i32
    %c0_i32_1 = arith.constant 0 : i32
    %c0_i32_2 = arith.constant 0 : i32
    return %c0_i32, %c0_i32_0, %c0_i32_1 : i32, i32, i32
  }
  func.func @transform_8(%arg0: i32) -> (i32, i32) {
    %c0_i32 = arith.constant 0 : i32
    %c0_i32_0 = arith.constant 0 : i32
    return %arg0, %c0_i32 : i32, i32
  }
}

</mosaic_0001>

<llo_original>
// kernel: tpu_custom_call.1
$region0: #{tpu_custom_call.1}
  #allocation0 [shape = 'u32[]', space=smem, size = 0x4, offset = 0x4, fixed_abs, tag = 'smem constant byte address 0x4 - core index']
  #allocation1 [shape = 'u32[72,128]{1,0:T(1,128)}', space=vmem, size = 0x9000, scoped, tag = 'internal scratch']
  %s0 = inlined_call_operand.vmem [shape: f32[16,32], index: 0, kind: input, shape index: {}]
  %s1 = inlined_call_operand.vmem [shape: f32[16,1], index: 1, kind: input, shape index: {}]
  %s2 = inlined_call_operand.vmem [shape: bf16[2,32,64], index: 2, kind: input, shape index: {}]
  %s3 = inlined_call_operand.vmem [shape: f32[2,1,64], index: 3, kind: input, shape index: {}]
  %s4 = inlined_call_operand.vmem [shape: bf16[2,64,32], index: 4, kind: input, shape index: {}]
  %s5 = inlined_call_operand.vmem [shape: f32[2,1,32], index: 5, kind: input, shape index: {}]
  %s6 = inlined_call_operand.vmem [shape: f32[2,1,32], index: 6, kind: input, shape index: {}]
  %s7 = inlined_call_operand.vmem [shape: f32[2,1,32], index: 7, kind: input, shape index: {}]
  %s8 = inlined_call_operand.hbm [shape: f32[16,32], index: 8, kind: output, shape index: {}]
  %s9 = sld [smem:[#allocation0]]
  $region65: #{tpu_custom_call.1} parent=0
    _
  %s11 = ssub.s32 1, %s9
  %s12 = scalar_select 0, %s11, %s9
  $region1: #{tpu_custom_call.1} parent=0
    #allocation2 [shape = 'u8[8192]{0}', space=vmem, size = 0x2000, scoped, tag = 'output window, operand 0']
    #allocation3 [shape = 's32[2]{0}', space=sflag, size = 0x8, scoped, tag = 'scoped memory for tpu_custom_call.1']
    %13 = vsyncpa [#allocation3], 0
    %s14 = scalar_lea.sflag [#allocation3], 1
    %15 = vsyncpa %s14, 0
    loop: start=0, step=1, limit=4
    $region2: #{tpu_custom_call.1} parent=1 // loop_pre_header
      _
    $region3: #{tpu_custom_call.1} parent=1 // loop_header
      %s17 = sphi 0, %s21
      %p18 = scmp.ge.s32.totalorder %s17, 4
      %s27 = sphi 0, %s29
      %s30 = sphi 0, %s27
      %s31 = sphi 0, %s30
      %s47 = sphi 0, %s31
      %s53 = sphi 0, %s55
      %s56 = sphi 0, %s53
      %s57 = sphi 0, %s56
      %s73 = sphi 0, %s57
      %s77 = sphi 0, %s77
      %s79 = sphi 0, %s77
      %s80 = sphi 0, %s79
      %s94 = sphi 0, %s80
      %s98 = sphi 0, %s98
      %s100 = sphi 0, %s98
      %s101 = sphi 0, %s100
      %s115 = sphi 0, %s101
      %s119 = sphi 0, %s119
      %s121 = sphi 0, %s119
      %s122 = sphi 0, %s121
      %s136 = sphi 0, %s122
      %s140 = sphi 0, %s140
      %s142 = sphi 0, %s140
      %s143 = sphi 0, %s142
      %s157 = sphi 0, %s143
      %s161 = sphi 0, %s161
      %s163 = sphi 0, %s161
      %s164 = sphi 0, %s163
      %s178 = sphi 0, %s164
      %s182 = sphi 0, %s182
      %s184 = sphi 0, %s182
      %s185 = sphi 0, %s184
      %s199 = sphi 0, %s185
      %s205 = sphi 0, %s207
      %s208 = sphi 0, %s205
      %s209 = sphi 0, %s208
      %s225 = sphi 0, %s209
    $region4: #{tpu_custom_call.1} parent=1 // loop_header_branch
      %20 = sbr.rel (%p18) target = $region8
    $region5: #{tpu_custom_call.1} parent=1 // loop_body
      %s22 = ssub.s32 %s17, 1
      %s23 = ssub.s32 %s17, 2
      %s24 = sadd.s32 %s17, 1
      %s25 = ssub.s32 %s17, %s24
      %p26 = scmp.eq.s32.totalorder %s25, 0
      %s28 = sadd.s32 %s27, 1
      %s29 = scalar_select %p26, %s27, %s28
      %p32 = pneg %p26
      %p33 = scmp.eq.s32.totalorder %s17, 1
      %p34 = por %p32, %p33
      %p35 = scmp.ne.s32.totalorder %s27, %s30
      %p36 = scmp.eq.s32.totalorder %s17, 0
      %p37 = por %p35, %p36
      %p38 = scmp.ne.s32.totalorder %s27, %s30
      %p39 = scmp.eq.s32.totalorder %s22, 1
      %p40 = por %p38, %p39
      %p41 = scmp.ne.s32.totalorder %s30, %s31
      %p42 = scmp.eq.s32.totalorder %s22, 0
      %p43 = por %p41, %p42
      %p44 = scmp.ne.s32.totalorder %s30, %s31
      %p45 = scmp.eq.s32.totalorder %s23, 1
      %p46 = por %p44, %p45
      %p48 = scmp.ne.s32.totalorder %s31, %s47
      %p49 = scmp.eq.s32.totalorder %s23, 0
      %p50 = por %p48, %p49
      %s51 = ssub.s32 %s17, %s24
      %p52 = scmp.eq.s32.totalorder %s51, 0
      %s54 = sadd.s32 %s53, 1
      %s55 = scalar_select %p52, %s53, %s54
      %p58 = pneg %p52
      %p59 = scmp.eq.s32.totalorder %s17, 1
      %p60 = por %p58, %p59
      %p61 = scmp.ne.s32.totalorder %s53, %s56
      %p62 = scmp.eq.s32.totalorder %s17, 0
      %p63 = por %p61, %p62
      %p64 = scmp.ne.s32.totalorder %s53, %s56
      %p65 = scmp.eq.s32.totalorder %s22, 1
      %p66 = por %p64, %p65
      %p67 = scmp.ne.s32.totalorder %s56, %s57
      %p68 = scmp.eq.s32.totalorder %s22, 0
      %p69 = por %p67, %p68
      %p70 = scmp.ne.s32.totalorder %s56, %s57
      %p71 = scmp.eq.s32.totalorder %s23, 1
      %p72 = por %p70, %p71
      %p74 = scmp.ne.s32.totalorder %s57, %s73
      %p75 = scmp.eq.s32.totalorder %s23, 0
      %p76 = por %p74, %p75
      %s78 = sadd.s32 %s77, 1
      %p81 = scmp.eq.s32.totalorder %s17, 1
      %p82 = scmp.ne.s32.totalorder %s77, %s79
      %p83 = scmp.eq.s32.totalorder %s17, 0
      %p84 = por %p82, %p83
      %p85 = scmp.ne.s32.totalorder %s77, %s79
      %p86 = scmp.eq.s32.totalorder %s22, 1
      %p87 = por %p85, %p86
      %p88 = scmp.ne.s32.totalorder %s79, %s80
      %p89 = scmp.eq.s32.totalorder %s22, 0
      %p90 = por %p88, %p89
      %p91 = scmp.ne.s32.totalorder %s79, %s80
      %p92 = scmp.eq.s32.totalorder %s23, 1
      %p93 = por %p91, %p92
      %p95 = scmp.ne.s32.totalorder %s80, %s94
      %p96 = scmp.eq.s32.totalorder %s23, 0
      %p97 = por %p95, %p96
      %s99 = sadd.s32 %s98, 1
      %p102 = scmp.eq.s32.totalorder %s17, 1
      %p103 = scmp.ne.s32.totalorder %s98, %s100
      %p104 = scmp.eq.s32.totalorder %s17, 0
      %p105 = por %p103, %p104
      %p106 = scmp.ne.s32.totalorder %s98, %s100
      %p107 = scmp.eq.s32.totalorder %s22, 1
      %p108 = por %p106, %p107
      %p109 = scmp.ne.s32.totalorder %s100, %s101
      %p110 = scmp.eq.s32.totalorder %s22, 0
      %p111 = por %p109, %p110
      %p112 = scmp.ne.s32.totalorder %s100, %s101
      %p113 = scmp.eq.s32.totalorder %s23, 1
      %p114 = por %p112, %p113
      %p116 = scmp.ne.s32.totalorder %s101, %s115
      %p117 = scmp.eq.s32.totalorder %s23, 0
      %p118 = por %p116, %p117
      %s120 = sadd.s32 %s119, 1
      %p123 = scmp.eq.s32.totalorder %s17, 1
      %p124 = scmp.ne.s32.totalorder %s119, %s121
      %p125 = scmp.eq.s32.totalorder %s17, 0
      %p126 = por %p124, %p125
      %p127 = scmp.ne.s32.totalorder %s119, %s121
      %p128 = scmp.eq.s32.totalorder %s22, 1
      %p129 = por %p127, %p128
      %p130 = scmp.ne.s32.totalorder %s121, %s122
      %p131 = scmp.eq.s32.totalorder %s22, 0
      %p132 = por %p130, %p131
      %p133 = scmp.ne.s32.totalorder %s121, %s122
      %p134 = scmp.eq.s32.totalorder %s23, 1
      %p135 = por %p133, %p134
      %p137 = scmp.ne.s32.totalorder %s122, %s136
      %p138 = scmp.eq.s32.totalorder %s23, 0
      %p139 = por %p137, %p138
      %s141 = sadd.s32 %s140, 1
      %p144 = scmp.eq.s32.totalorder %s17, 1
      %p145 = scmp.ne.s32.totalorder %s140, %s142
      %p146 = scmp.eq.s32.totalorder %s17, 0
      %p147 = por %p145, %p146
      %p148 = scmp.ne.s32.totalorder %s140, %s142
      %p149 = scmp.eq.s32.totalorder %s22, 1
      %p150 = por %p148, %p149
      %p151 = scmp.ne.s32.totalorder %s142, %s143
      %p152 = scmp.eq.s32.totalorder %s22, 0
      %p153 = por %p151, %p152
      %p154 = scmp.ne.s32.totalorder %s142, %s143
      %p155 = scmp.eq.s32.totalorder %s23, 1
      %p156 = por %p154, %p155
      %p158 = scmp.ne.s32.totalorder %s143, %s157
      %p159 = scmp.eq.s32.totalorder %s23, 0
      %p160 = por %p158, %p159
      %s162 = sadd.s32 %s161, 1
      %p165 = scmp.eq.s32.totalorder %s17, 1
      %p166 = scmp.ne.s32.totalorder %s161, %s163
      %p167 = scmp.eq.s32.totalorder %s17, 0
      %p168 = por %p166, %p167
      %p169 = scmp.ne.s32.totalorder %s161, %s163
      %p170 = scmp.eq.s32.totalorder %s22, 1
      %p171 = por %p169, %p170
      %p172 = scmp.ne.s32.totalorder %s163, %s164
      %p173 = scmp.eq.s32.totalorder %s22, 0
      %p174 = por %p172, %p173
      %p175 = scmp.ne.s32.totalorder %s163, %s164
      %p176 = scmp.eq.s32.totalorder %s23, 1
      %p177 = por %p175, %p176
      %p179 = scmp.ne.s32.totalorder %s164, %s178
      %p180 = scmp.eq.s32.totalorder %s23, 0
      %p181 = por %p179, %p180
      %s183 = sadd.s32 %s182, 1
      %p186 = scmp.eq.s32.totalorder %s17, 1
      %p187 = scmp.ne.s32.totalorder %s182, %s184
      %p188 = scmp.eq.s32.totalorder %s17, 0
      %p189 = por %p187, %p188
      %p190 = scmp.ne.s32.totalorder %s182, %s184
      %p191 = scmp.eq.s32.totalorder %s22, 1
      %p192 = por %p190, %p191
      %p193 = scmp.ne.s32.totalorder %s184, %s185
      %p194 = scmp.eq.s32.totalorder %s22, 0
      %p195 = por %p193, %p194
      %p196 = scmp.ne.s32.totalorder %s184, %s185
      %p197 = scmp.eq.s32.totalorder %s23, 1
      %p198 = por %p196, %p197
      %p200 = scmp.ne.s32.totalorder %s185, %s199
      %p201 = scmp.eq.s32.totalorder %s23, 0
      %p202 = por %p200, %p201
      %s203 = ssub.s32 %s17, %s24
      %p204 = scmp.eq.s32.totalorder %s203, 0
      %s206 = sadd.s32 %s205, 1
      %s207 = scalar_select %p204, %s205, %s206
      %p210 = pneg %p204
      %p211 = scmp.eq.s32.totalorder %s17, 1
      %p212 = por %p210, %p211
      %p213 = scmp.ne.s32.totalorder %s205, %s208
      %p214 = scmp.eq.s32.totalorder %s17, 0
      %p215 = por %p213, %p214
      %p216 = scmp.ne.s32.totalorder %s205, %s208
      %p217 = scmp.eq.s32.totalorder %s22, 1
      %p218 = por %p216, %p217
      %p219 = scmp.ne.s32.totalorder %s208, %s209
      %p220 = scmp.eq.s32.totalorder %s22, 0
      %p221 = por %p219, %p220
      %p222 = scmp.ne.s32.totalorder %s208, %s209
      %p223 = scmp.eq.s32.totalorder %s23, 1
      %p224 = por %p222, %p223
      %p226 = scmp.ne.s32.totalorder %s209, %s225
      %p227 = scmp.eq.s32.totalorder %s23, 0
      %p228 = por %p226, %p227
      %p229 = scmp.le.s32.totalorder 1, %s17
      %p230 = scmp.lt.s32.totalorder %s17, 3
      %p231 = pnand %p229, %p230
      %p232 = pneg %p231
      // Predicated region
      $region9: #{tpu_custom_call.1} parent=5 // pred_check
        _
      $region10: #{tpu_custom_call.1} parent=5 // pred_check_branch
        %234 = sbr.rel (%p231) target = $region12
      $region11: #{tpu_custom_call.1} parent=5 // pred_region
        %s235 = ssub.s32 %s17, 1
        // Predicated region
        $region13: #{tpu_custom_call.1} parent=11 // pred_check
          %p236 = pneg %p90
        $region14: #{tpu_custom_call.1} parent=11 // pred_check_branch
          %238 = sbr.rel (%p236) target = $region16
        $region15: #{tpu_custom_call.1} parent=11 // pred_region
          _
        $region16: #{tpu_custom_call.1} parent=11 // pred_fallthru
          _
        // Predicated region
        $region17: #{tpu_custom_call.1} parent=11 // pred_check
          %p239 = pneg %p111
        $region18: #{tpu_custom_call.1} parent=11 // pred_check_branch
          %241 = sbr.rel (%p239) target = $region20
        $region19: #{tpu_custom_call.1} parent=11 // pred_region
          _
        $region20: #{tpu_custom_call.1} parent=11 // pred_fallthru
          _
        // Predicated region
        $region21: #{tpu_custom_call.1} parent=11 // pred_check
          %p242 = pneg %p132
        $region22: #{tpu_custom_call.1} parent=11 // pred_check_branch
          %244 = sbr.rel (%p242) target = $region24
        $region23: #{tpu_custom_call.1} parent=11 // pred_region
          _
        $region24: #{tpu_custom_call.1} parent=11 // pred_fallthru
          _
        // Predicated region
        $region25: #{tpu_custom_call.1} parent=11 // pred_check
          %p245 = pneg %p153
        $region26: #{tpu_custom_call.1} parent=11 // pred_check_branch
          %247 = sbr.rel (%p245) target = $region28
        $region27: #{tpu_custom_call.1} parent=11 // pred_region
          _
        $region28: #{tpu_custom_call.1} parent=11 // pred_fallthru
          _
        // Predicated region
        $region29: #{tpu_custom_call.1} parent=11 // pred_check
          %p248 = pneg %p174
        $region30: #{tpu_custom_call.1} parent=11 // pred_check_branch
          %250 = sbr.rel (%p248) target = $region32
        $region31: #{tpu_custom_call.1} parent=11 // pred_region
          _
        $region32: #{tpu_custom_call.1} parent=11 // pred_fallthru
          _
        // Predicated region
        $region33: #{tpu_custom_call.1} parent=11 // pred_check
          %p251 = pneg %p195
        $region34: #{tpu_custom_call.1} parent=11 // pred_check_branch
          %253 = sbr.rel (%p251) target = $region36
        $region35: #{tpu_custom_call.1} parent=11 // pred_region
          _
        $region36: #{tpu_custom_call.1} parent=11 // pred_fallthru
          _
      $region12: #{tpu_custom_call.1} parent=5 // pred_fallthru
        _
      %p254 = scmp.lt.s32.totalorder %s17, 2
      // Predicated region
      $region37: #{tpu_custom_call.1} parent=5 // pred_check
        %p255 = pneg %p254
      $region38: #{tpu_custom_call.1} parent=5 // pred_check_branch
        %257 = sbr.rel (%p255) target = $region40
      $region39: #{tpu_custom_call.1} parent=5 // pred_region
        // Predicated region
        $region41: #{tpu_custom_call.1} parent=39 // pred_check
          %p258 = pneg %p37
        $region42: #{tpu_custom_call.1} parent=39 // pred_check_branch
          %260 = sbr.rel (%p258) target = $region44
        $region43: #{tpu_custom_call.1} parent=39 // pred_region
          %p261 = scmp.lt.s32.totalorder %s17, 1
          %s262 = scalar_select %p261, %s17, 1
          %s263 = smul.addr %s262, 8
          %s264 = scalar_lea.vmem %s0, %s263
        $region44: #{tpu_custom_call.1} parent=39 // pred_fallthru
          _
        // Predicated region
        $region45: #{tpu_custom_call.1} parent=39 // pred_check
          %p265 = pneg %p63
        $region46: #{tpu_custom_call.1} parent=39 // pred_check_branch
          %267 = sbr.rel (%p265) target = $region48
        $region47: #{tpu_custom_call.1} parent=39 // pred_region
          %p268 = scmp.lt.s32.totalorder %s17, 1
          %s269 = scalar_select %p268, %s17, 1
          %s270 = smul.addr %s269, 8
          %s271 = scalar_lea.vmem %s1, %s270
        $region48: #{tpu_custom_call.1} parent=39 // pred_fallthru
          _
      $region40: #{tpu_custom_call.1} parent=5 // pred_fallthru
        _
      %p272 = scmp.le.s32.totalorder 1, %s17
      %p273 = scmp.lt.s32.totalorder %s17, 3
      %p274 = pnand %p272, %p273
      %p275 = pneg %p274
      // Predicated region
      $region49: #{tpu_custom_call.1} parent=5 // pred_check
        _
      $region50: #{tpu_custom_call.1} parent=5 // pred_check_branch
        %277 = sbr.rel (%p274) target = $region52
      $region51: #{tpu_custom_call.1} parent=5 // pred_region
        %s278 = ssub.s32 %s17, 1
        %p279 = scmp.lt.s32.totalorder %s22, 1
        %s280 = scalar_select %p279, %s22, 1
        %s281 = smul.addr %s280, 8
        %s282 = scalar_lea.vmem %s0, %s281
        %p283 = pneg %p43
        %p284 = pneg %p40
        %p285 = scmp.lt.s32.totalorder %s22, 1
        %s286 = scalar_select %p285, %s22, 1
        %s287 = smul.addr %s286, 8
        %s288 = scalar_lea.vmem %s1, %s287
        %p289 = pneg %p69
        %p290 = pneg %p66
        %p291 = pneg %p90
        %p292 = pneg %p87
        %p293 = pneg %p111
        %p294 = pneg %p108
        %p295 = pneg %p132
        %p296 = pneg %p129
        %p297 = pneg %p153
        %p298 = pneg %p150
        %p299 = pneg %p174
        %p300 = pneg %p171
        %p301 = pneg %p195
        %p302 = pneg %p192
        %p303 = pneg %p221
        %p304 = pneg %p218
        %s305 = sand.u32 %s208, 1
        %s306 = scalar_lea.sflag [#allocation3], %s305
        %s307 = sand.u32 %s208, 1
        %s308 = smul.addr %s307, 8
        %s309 = scalar_lea.vmem [#allocation2], %s308
        %p310 = scmp.lt.s32.totalorder %s22, 1
        %s311 = scalar_select %p310, %s22, 1
        %s312 = smul.addr %s311, 8
        %s313 = scalar_lea.vmem %s0, %s312
        %p314 = scmp.lt.s32.totalorder %s22, 1
        %s315 = scalar_select %p314, %s22, 1
        %s316 = smul.addr %s315, 8
        %s317 = scalar_lea.vmem %s1, %s316
        %v319 = vld [vmem:[%s313] sm:$0xff]
        %v320 = vld [vmem:[%s317] sm:$0xff]
        %v321 = vpack.c.bf16 %v319, %v319
        %v322 = vld [vmem:[%s2] sm:$0xf]
        %v323 = vld [vmem:[%s2 + $0x4] sm:$0xf]
        %v324 = vld [vmem:[%s2 + $0x8] sm:$0xf]
        %v325 = vld [vmem:[%s2 + $0xc] sm:$0xf]
        %v326 = vld [vmem:[%s3] sm:$0x1]
        %v328 = vperm.slane %v326, 0
        %v334 = vunpack.c.l.b16 %v322
        %v335 = vunpack.c.l.b16 %v323
        %v336 = vunpack.c.l.b16 %v324
        %v337 = vunpack.c.l.b16 %v325
        %v338 = vpack.c.b16 %v335, %v334
        %v339 = vpack.c.b16 %v337, %v336
        %vm342 = vcmask 261120
        %v344 = vsel %vm342, %v321, 0
        %346 = vmatpush.bf16.msra.mxu0 0
        %347 = vmatpush.bf16.msra.mxu0 0
        %348 = vmatpush.bf16.msra.mxu0 0
        %349 = vmatpush.bf16.msra.mxu0 0
        %350 = vmatpush.bf16.msra.mxu0 0
        %351 = vmatpush.bf16.msra.mxu0 0
        %352 = vmatpush.bf16.msra.mxu0 %v339
        %353 = vmatpush.bf16.msra.mxu0 %v338
        %354 = vmatmul.bf16.gmra.mxu0 %v344
        %v355 = vpop.f32.mrf.mxu0
        %v356 = vadd.f32 %v328, %v355
        %v357 = vpop.f32.mrf.mxu0
        %358 = vdwg.mxu0
        %v359 = vmax.f32 %v356, 0.0
        %v360 = vpack.c.bf16 %v359, %v359
        %v361 = vld [vmem:[%s4] sm:$0xf]
        %v362 = vld [vmem:[%s4 + $0x4] sm:$0xf]
        %v363 = vld [vmem:[%s4 + $0x8] sm:$0xf]
        %v364 = vld [vmem:[%s4 + $0xc] sm:$0xf]
        %v365 = vld [vmem:[%s4 + $0x10] sm:$0xf]
        %v366 = vld [vmem:[%s4 + $0x14] sm:$0xf]
        %v367 = vld [vmem:[%s4 + $0x18] sm:$0xf]
        %v368 = vld [vmem:[%s4 + $0x1c] sm:$0xf]
        %v369 = vld [vmem:[%s5] sm:$0x1]
        %v371 = vperm.slane %v369, 0
        %v381 = vunpack.c.l.b16 %v361
        %v382 = vunpack.c.l.b16 %v362
        %v383 = vunpack.c.l.b16 %v363
        %v384 = vunpack.c.l.b16 %v364
        %v385 = vunpack.c.l.b16 %v365
        %v386 = vunpack.c.l.b16 %v366
        %v387 = vunpack.c.l.b16 %v367
        %v388 = vunpack.c.l.b16 %v368
        %v389 = vpack.c.b16 %v382, %v381
        %v390 = vpack.c.b16 %v384, %v383
        %v391 = vpack.c.b16 %v386, %v385
        %v392 = vpack.c.b16 %v388, %v387
        %vm397 = vcmask 523264
        %v399 = vsel %vm397, %v360, 0
        %401 = vmatpush.bf16.msra.mxu0 0
        %402 = vmatpush.bf16.msra.mxu0 0
        %403 = vmatpush.bf16.msra.mxu0 0
        %404 = vmatpush.bf16.msra.mxu0 0
        %405 = vmatpush.bf16.msra.mxu0 %v392
        %406 = vmatpush.bf16.msra.mxu0 %v391
        %407 = vmatpush.bf16.msra.mxu0 %v390
        %408 = vmatpush.bf16.msra.mxu0 %v389
        %409 = vmatmul.bf16.gmra.mxu0 %v399
        %v410 = vpop.f32.mrf.mxu0
        %v411 = vadd.f32 %v371, %v410
        %v412 = vpop.f32.mrf.mxu0
        %413 = vdwg.mxu0
        %v414 = vadd.f32 %v411, %v319
        %v415 = vsel %vm342, %v414, 0.0
        %416 = vadd.xlane.f32.xlu0 %v415
        %v417 = vpop.xlane.xlu0 %416
        %v418 = vmul.f32 %v417, 0.03125
        %v419 = vsub.f32 %v414, %v418
        %v420 = vmul.f32 %v419, %v419
        %v421 = vsel %vm342, %v420, 0.0
        %422 = vadd.xlane.f32.xlu0 %v421
        %v423 = vpop.xlane.xlu0 %422
        %v424 = vmul.f32 %v423, 0.03125
        %v425 = vadd.f32 %v424, 1e-05
        %v426 = vrsqrt.pop %v425
        %v427 = vmul.f32 %v426, %v425
        %v428 = vmul.f32 %v427, %v426
        %v429 = vmul.f32 0.5, %v428
        %v430 = vsub.f32 1.5, %v429
        %v431 = vmul.f32 %v426, %v430
        %vm432 = vweird.f32 %v425
        %vm433 = vweird.f32 %v426
        %vm434 = vmor %vm432, %vm433
        %v435 = vsel %vm434, %v426, %v431
        %v436 = vmul.f32 %v419, %v435
        %v437 = vld [vmem:[%s6] sm:$0x1]
        %v439 = vperm.slane %v437, 0
        %v441 = vmul.f32 %v436, %v439
        %v442 = vld [vmem:[%s7] sm:$0x1]
        %v444 = vperm.slane %v442, 0
        %v446 = vadd.f32 %v441, %v444
        %448 = vset.pattern.permute.xlu0 0
        %449 = vperm.xlu0 %448, %v320
        %v450 = vpop.permute.xlu0 %449
        %v452 = vmul.f32 %v446, %v450
        %v453 = vpack.c.bf16 %v452, %v452
        %s454 = scalar_lea.vmem %s2, 16
        %v455 = vld [vmem:[%s454] sm:$0xf]
        %v456 = vld [vmem:[%s454 + $0x4] sm:$0xf]
        %v457 = vld [vmem:[%s454 + $0x8] sm:$0xf]
        %v458 = vld [vmem:[%s454 + $0xc] sm:$0xf]
        %s459 = scalar_lea.vmem %s3, 1
        %v460 = vld [vmem:[%s459] sm:$0x1]
        %v462 = vperm.slane %v460, 0
        %v468 = vunpack.c.l.b16 %v455
        %v469 = vunpack.c.l.b16 %v456
        %v470 = vunpack.c.l.b16 %v457
        %v471 = vunpack.c.l.b16 %v458
        %v472 = vpack.c.b16 %v469, %v468
        %v473 = vpack.c.b16 %v471, %v470
        %v477 = vsel %vm342, %v453, 0
        %479 = vmatpush.bf16.msra.mxu0 0
        %480 = vmatpush.bf16.msra.mxu0 0
        %481 = vmatpush.bf16.msra.mxu0 0
        %482 = vmatpush.bf16.msra.mxu0 0
        %483 = vmatpush.bf16.msra.mxu0 0
        %484 = vmatpush.bf16.msra.mxu0 0
        %485 = vmatpush.bf16.msra.mxu0 %v473
        %486 = vmatpush.bf16.msra.mxu0 %v472
        %487 = vmatmul.bf16.gmra.mxu0 %v477
        %v488 = vpop.f32.mrf.mxu0
        %v489 = vadd.f32 %v462, %v488
        %v490 = vpop.f32.mrf.mxu0
        %491 = vdwg.mxu0
        %v492 = vmax.f32 %v489, 0.0
        %v493 = vpack.c.bf16 %v492, %v492
        %s494 = scalar_lea.vmem %s4, 32
        %v495 = vld [vmem:[%s494] sm:$0xf]
        %v496 = vld [vmem:[%s494 + $0x4] sm:$0xf]
        %v497 = vld [vmem:[%s494 + $0x8] sm:$0xf]
        %v498 = vld [vmem:[%s494 + $0xc] sm:$0xf]
        %v499 = vld [vmem:[%s494 + $0x10] sm:$0xf]
        %v500 = vld [vmem:[%s494 + $0x14] sm:$0xf]
        %v501 = vld [vmem:[%s494 + $0x18] sm:$0xf]
        %v502 = vld [vmem:[%s494 + $0x1c] sm:$0xf]
        %s503 = scalar_lea.vmem %s5, 1
        %v504 = vld [vmem:[%s503] sm:$0x1]
        %v506 = vperm.slane %v504, 0
        %v516 = vunpack.c.l.b16 %v495
        %v517 = vunpack.c.l.b16 %v496
        %v518 = vunpack.c.l.b16 %v497
        %v519 = vunpack.c.l.b16 %v498
        %v520 = vunpack.c.l.b16 %v499
        %v521 = vunpack.c.l.b16 %v500
        %v522 = vunpack.c.l.b16 %v501
        %v523 = vunpack.c.l.b16 %v502
        %v524 = vpack.c.b16 %v517, %v516
        %v525 = vpack.c.b16 %v519, %v518
        %v526 = vpack.c.b16 %v521, %v520
        %v527 = vpack.c.b16 %v523, %v522
        %v533 = vsel %vm397, %v493, 0
        %535 = vmatpush.bf16.msra.mxu0 0
        %536 = vmatpush.bf16.msra.mxu0 0
        %537 = vmatpush.bf16.msra.mxu0 0
        %538 = vmatpush.bf16.msra.mxu0 0
        %539 = vmatpush.bf16.msra.mxu0 %v527
        %540 = vmatpush.bf16.msra.mxu0 %v526
        %541 = vmatpush.bf16.msra.mxu0 %v525
        %542 = vmatpush.bf16.msra.mxu0 %v524
        %543 = vmatmul.bf16.gmra.mxu0 %v533
        %v544 = vpop.f32.mrf.mxu0
        %v545 = vadd.f32 %v506, %v544
        %v546 = vpop.f32.mrf.mxu0
        %547 = vdwg.mxu0
        %v548 = vadd.f32 %v545, %v452
        %v549 = vsel %vm342, %v548, 0.0
        %550 = vadd.xlane.f32.xlu0 %v549
        %v551 = vpop.xlane.xlu0 %550
        %v552 = vmul.f32 %v551, 0.03125
        %v553 = vsub.f32 %v548, %v552
        %v554 = vmul.f32 %v553, %v553
        %v555 = vsel %vm342, %v554, 0.0
        %556 = vadd.xlane.f32.xlu0 %v555
        %v557 = vpop.xlane.xlu0 %556
        %v558 = vmul.f32 %v557, 0.03125
        %v559 = vadd.f32 %v558, 1e-05
        %v560 = vrsqrt.pop %v559
        %v561 = vmul.f32 %v560, %v559
        %v562 = vmul.f32 %v561, %v560
        %v563 = vmul.f32 0.5, %v562
        %v564 = vsub.f32 1.5, %v563
        %v565 = vmul.f32 %v560, %v564
        %vm566 = vweird.f32 %v559
        %vm567 = vweird.f32 %v560
        %vm568 = vmor %vm566, %vm567
        %v569 = vsel %vm568, %v560, %v565
        %v570 = vmul.f32 %v553, %v569
        %s571 = scalar_lea.vmem %s6, 1
        %v572 = vld [vmem:[%s571] sm:$0x1]
        %v574 = vperm.slane %v572, 0
        %v576 = vmul.f32 %v570, %v574
        %s577 = scalar_lea.vmem %s7, 1
        %v578 = vld [vmem:[%s577] sm:$0x1]
        %v580 = vperm.slane %v578, 0
        %v582 = vadd.f32 %v576, %v580
        %v583 = vmul.f32 %v582, %v450
        %584 = vst.msk [vmem:[%s309] sm:$0xff] %vm342, %v583
        %s585 = sand.u32 %s208, 1
        %s586 = scalar_lea.sflag [#allocation3], %s585
        %s587 = sand.u32 %s208, 1
        %s588 = smul.addr %s587, 8
        %s589 = scalar_lea.vmem [#allocation2], %s588
        // Predicated region
        $region53: #{tpu_custom_call.1} parent=51 // pred_check
          %p590 = pneg %p218
        $region54: #{tpu_custom_call.1} parent=51 // pred_check_branch
          %592 = sbr.rel (%p590) target = $region56
        $region55: #{tpu_custom_call.1} parent=51 // pred_region
          %594 = vsyncadd %s586, 0
          %s595 = smul.addr %s22, 8
          %s596 = scalar_lea.hbm %s8, %s595
          %s598 = sshll.u32 %s589, 4
          %s599 = int_to_ptr.vmem [resolvable:$true] %s598
          %s600 = sshll.u32 %s596, 4
          %s601 = int_to_ptr.hbm [resolvable:$true] %s600
          %603 = dma.vmem_to_hbm [thread:$0]  %s599, 128, %s601, %s586
        $region56: #{tpu_custom_call.1} parent=51 // pred_fallthru
          _
      $region52: #{tpu_custom_call.1} parent=5 // pred_fallthru
        _
      %p604 = scmp.le.s32.totalorder 2, %s17
      // Predicated region
      $region57: #{tpu_custom_call.1} parent=5 // pred_check
        %p605 = pneg %p604
      $region58: #{tpu_custom_call.1} parent=5 // pred_check_branch
        %607 = sbr.rel (%p605) target = $region60
      $region59: #{tpu_custom_call.1} parent=5 // pred_region
        %s608 = ssub.s32 %s17, 2
        // Predicated region
        $region61: #{tpu_custom_call.1} parent=59 // pred_check
          %p609 = pneg %p224
        $region62: #{tpu_custom_call.1} parent=59 // pred_check_branch
          %611 = sbr.rel (%p609) target = $region64
        $region63: #{tpu_custom_call.1} parent=59 // pred_region
          %s612 = sand.u32 %s209, 1
          %s613 = scalar_lea.sflag [#allocation3], %s612
          %s614 = sand.u32 %s209, 1
          %s615 = smul.addr %s614, 8
          %s616 = scalar_lea.vmem [#allocation2], %s615
          %618 = dma.done %s613, 128
        $region64: #{tpu_custom_call.1} parent=59 // pred_fallthru
          _
      $region60: #{tpu_custom_call.1} parent=5 // pred_fallthru
        _
    $region6: #{tpu_custom_call.1} parent=1 // loop_footer
      %s21 = sadd.s32 1, %s17
    $region7: #{tpu_custom_call.1} parent=1 // loop_footer_branch
      %16 = sbr.rel target = $region3
    $region8: #{tpu_custom_call.1} parent=1 // loop_exit
      _
    %619 = vsyncpa [#allocation3], 1
    %s620 = scalar_lea.sflag [#allocation3], 1
    %621 = vsyncpa %s620, 1

</llo_original>
